<compile_context>
chip_gen: v7x
topology: tpu7x:2x2x1
jax: 0.10.0
libtpu: 0.0.40
codegen_flags: <defaults>
</compile_context>

<pallas_src>
import functools

import jax
import jax.numpy as jnp
from jax import lax
from jax.experimental import pallas as pl
from jax.experimental.pallas import tpu as pltpu


def _cdiv(a: int, b: int) -> int:
    return -(-a // b)


def _round_up(x: int, m: int) -> int:
    return _cdiv(x, m) * m


def _sublane(itemsize: int) -> int:
    # dtype-aware sublane granularity: f32 -> 8, bf16 -> 16, int8/fp8 -> 32
    return {4: 8, 2: 16, 1: 32}.get(itemsize, 8)


def _balanced_tile(dim: int, preferred: int, align: int) -> int:
    """Tile <= preferred covering `dim` with minimal overhang (no cliff-edge padding)."""
    if dim <= preferred:
        return dim  # single full-extent block (allowed regardless of alignment)
    nblk = _cdiv(dim, preferred)
    return _round_up(_cdiv(dim, nblk), align)


def _vmem_limit_bytes() -> int:
    cap = 64 * 1024 * 1024  # conservative default (v7x physical per-TC)
    try:
        cap = int(pltpu.get_tpu_info().vmem_capacity_bytes)
    except Exception:
        pass
    # ~75% of physical, capped: 96 MiB on v5e/v6e (128 MiB phys), 48 MiB on v7x (64 MiB phys)
    return max(32 * 1024 * 1024, min(cap * 3 // 4, 96 * 1024 * 1024))


# --------------------------------------------------------------------------- #
# Kernels
# --------------------------------------------------------------------------- #
def _fused_kernel(x_ref, w_ref, b_ref, o_ref):
    # x_ref: (Eblk, tm, In)  w_ref: (Eblk, In, Out)  b_ref: (Eblk, 1, Out)  o_ref: (Eblk, tm, Out)
    # Statically unrolled loop over the fused ensemble members: one clean MXU
    # pass per member, bias added in f32, single cast, direct store (no acc).
    for e in range(x_ref.shape[0]):
        acc = jnp.dot(x_ref[e], w_ref[e], preferred_element_type=jnp.float32)
        o_ref[e] = (acc + b_ref[e].astype(jnp.float32)).astype(o_ref.dtype)


def _make_tiled_kernel(num_k: int, tk: int, k_total: int):
    k_tail = (num_k * tk != k_total)  # static: does the last K block overhang?

    def kernel(x_ref, w_ref, b_ref, o_ref, *scratch):
        # x_ref: (tm, tk)  w_ref: (tk, tn)  b_ref: (1, tn)  o_ref: (tm, tn)
        k = pl.program_id(3)
        x = x_ref[...]
        w = w_ref[...]
        if k_tail:
            # The boundary K block holds undefined values past `k_total`; zero
            # them on BOTH operands so the contraction is exact and safe even
            # against NaN garbage bits. For non-final K steps the mask is
            # all-true (cheap VPU pass vs the MXU work of the tile).
            kbase = k * tk
            x = jnp.where(
                lax.broadcasted_iota(jnp.int32, x.shape, 1) + kbase < k_total, x, 0)
            w = jnp.where(
                lax.broadcasted_iota(jnp.int32, w.shape, 0) + kbase < k_total, w, 0)

        prod = jnp.dot(x, w, preferred_element_type=jnp.float32)

        if num_k == 1:
            # Single K block: no accumulator needed, write straight out.
            o_ref[...] = (prod + b_ref[...].astype(jnp.float32)).astype(o_ref.dtype)
        else:
            acc_ref, = scratch

            @pl.when(k == 0)
            def _first():
                acc_ref[...] = prod          # assign, no redundant zero-init pass

            @pl.when(k > 0)
            def _accum():
                acc_ref[...] += prod

            @pl.when(k == num_k - 1)
            def _finalize():
                o_ref[...] = (acc_ref[...] + b_ref[...].astype(jnp.float32)
                              ).astype(o_ref.dtype)

    return kernel


# --------------------------------------------------------------------------- #
# Wrapper
# --------------------------------------------------------------------------- #
@functools.partial(jax.jit, static_argnames=("max_vmem_budget",))
def ensemble_fc(x, weight, bias, *, max_vmem_budget=None):
    """EnsembleFC forward: torch.bmm(x, weight) + bias, f32 MXU accumulation.

    x: (E, B, In), weight: (E, In, Out), bias: (E, 1, Out) -> (E, B, Out).
    `max_vmem_budget` (bytes, static) only constrains tile selection (testing).
    """
    E, B, In = x.shape
    Ew, Inw, Out = weight.shape           # shape unpacking outside asserts
    assert (Ew, Inw) == (E, In), "weight shape mismatch"
    assert bias.shape == (E, 1, Out), "bias shape mismatch"

    dtype = x.dtype
    itemsize = jnp.dtype(dtype).itemsize
    sub = _sublane(itemsize)

    vmem_limit = _vmem_limit_bytes()
    budget = int(vmem_limit * 0.7)        # headroom for Mosaic internal scratch
    if max_vmem_budget is not None:
        budget = min(budget, int(max_vmem_budget))

    cost = pl.CostEstimate(
        flops=2 * E * B * In * Out,
        transcendentals=0,
        bytes_accessed=itemsize * (E * B * In + E * In * Out + E * Out + E * B * Out),
    )

    # ---------------- fused fast path: full K and N per member ---------------- #
    tm_f = _balanced_tile(B, 512, sub)
    # double-buffered bytes for ONE member at full K/N (x tile + weight + bias + out tile)
    per_member = 2 * (tm_f * In + In * Out + Out + tm_f * Out) * itemsize

    if per_member <= budget:
        e_cap = int(max(1, min(E, budget // per_member, 8)))
        eblk = 1
        for cand in range(e_cap, 0, -1):          # largest divisor of E <= cap
            if E % cand == 0:
                eblk = cand
                break
        # Keep >= 2 parallel grid steps so both TensorCores of a v7x chip get
        # work (costs only ~0.35us of extra per-step overhead on 1-TC chips).
        if E >= 2 and _cdiv(B, tm_f) * (E // eblk) < 2:
            half = _cdiv(E, 2)
            for cand in range(min(eblk, half), 0, -1):
                if E % cand == 0:
                    eblk = cand
                    break

        grid = (E // eblk, _cdiv(B, tm_f))
        return pl.pallas_call(
            _fused_kernel,
            out_shape=jax.ShapeDtypeStruct((E, B, Out), dtype),
            grid_spec=pltpu.PrefetchScalarGridSpec(
                num_scalar_prefetch=0,
                grid=grid,
                in_specs=[
                    pl.BlockSpec((eblk, tm_f, In), lambda eb, i: (eb, i, 0)),
                    # weight / bias blocks stay resident across the M sweep per eb
                    pl.BlockSpec((eblk, In, Out), lambda eb, i: (eb, 0, 0)),
                    pl.BlockSpec((eblk, 1, Out), lambda eb, i: (eb, 0, 0)),
                ],
                out_specs=pl.BlockSpec((eblk, tm_f, Out), lambda eb, i: (eb, i, 0)),
            ),
            compiler_params=pltpu.CompilerParams(
                dimension_semantics=("parallel", "parallel"),
                vmem_limit_bytes=vmem_limit,
            ),
            cost_estimate=cost,
        )(x, weight, bias)

    # ---------------- general tiled path: grid (E, M, N, K), K innermost -------- #
    tm = _balanced_tile(B, 512, sub)
    tn = _balanced_tile(Out, 512, 128)
    tk = _balanced_tile(In, 1024, 128)

    def _ws(tm_, tn_, tk_):
        # 2x double-buffering on each streamed operand/result + f32 accumulator
        return (2 * (tm_ * tk_ + tk_ * tn_ + tn_ + tm_ * tn_) * itemsize
                + tm_ * tn_ * 4)

    for _ in range(32):
        if _ws(tm, tn, tk) <= budget:
            break
        if tk >= max(tm, tn) and tk > 128:
            tk = max(128, _round_up(tk // 2, 128))
        elif tn >= tm and tn > 128:
            tn = max(128, _round_up(tn // 2, 128))
        elif tm > sub:
            tm = max(sub, _round_up(tm // 2, sub))
        else:
            break  # best effort

    num_k = _cdiv(In, tk)
    grid = (E, _cdiv(B, tm), _cdiv(Out, tn), num_k)
    scratch = [] if num_k == 1 else [pltpu.VMEM((tm, tn), jnp.float32)]
    kernel = _make_tiled_kernel(num_k, tk, In)

    return pl.pallas_call(
        kernel,
        out_shape=jax.ShapeDtypeStruct((E, B, Out), dtype),
        grid_spec=pltpu.PrefetchScalarGridSpec(
            num_scalar_prefetch=0,
            grid=grid,
            in_specs=[
                pl.BlockSpec((pl.Squeezed(), tm, tk), lambda e, i, j, k: (e, i, k)),
                pl.BlockSpec((pl.Squeezed(), tk, tn), lambda e, i, j, k: (e, k, j)),
                pl.BlockSpec((pl.Squeezed(), 1, tn), lambda e, i, j, k: (e, 0, j)),
            ],
            out_specs=pl.BlockSpec((pl.Squeezed(), tm, tn), lambda e, i, j, k: (e, i, j)),
            scratch_shapes=scratch,
        ),
        compiler_params=pltpu.CompilerParams(
            # The accumulator pattern is only valid with K as the LAST grid axis
            # marked "arbitrary" — do not reorder these axes.
            dimension_semantics=("parallel", "parallel", "parallel", "arbitrary"),
            vmem_limit_bytes=vmem_limit,
        ),
        cost_estimate=cost,
    )(x, weight, bias)


def _reference(x, weight, bias):
    return (jnp.einsum("ebi,eio->ebo", x, weight,
                       precision=jax.lax.Precision.HIGHEST) + bias)


if __name__ == "__main__":
    key = jax.random.PRNGKey(0)

    # Test 1: small shapes matching the module defaults (fused fast path).
    E, B, In, Out = 4, 8, 32, 32
    k1, k2, k3, key = jax.random.split(key, 4)
    x = jax.random.normal(k1, (E, B, In), dtype=jnp.float32)
    w = jax.random.normal(k2, (E, In, Out), dtype=jnp.float32) * 0.1
    b = jax.random.normal(k3, (E, 1, Out), dtype=jnp.float32) * 0.1
    out = jax.block_until_ready(ensemble_fc(x, w, b))
    ref = _reference(x, w, b)
    assert out.shape == (E, B, Out)
    assert jnp.allclose(out, ref, atol=1e-5, rtol=1e-5), "mismatch (fused small)"

    # Test 2: non-aligned shapes, one ensemble member per grid step (fused path).
    E2, B2, In2, Out2 = 2, 300, 1100, 144
    k1, k2, k3, key = jax.random.split(key, 4)
    x2 = jax.random.normal(k1, (E2, B2, In2), dtype=jnp.float32)
    w2 = jax.random.normal(k2, (E2, In2, Out2), dtype=jnp.float32) * 0.05
    b2 = jax.random.normal(k3, (E2, 1, Out2), dtype=jnp.float32) * 0.1
    out2 = jax.block_until_ready(ensemble_fc(x2, w2, b2))
    ref2 = _reference(x2, w2, b2)
    assert out2.shape == (E2, B2, Out2)
    assert jnp.allclose(out2, ref2, atol=1e-4, rtol=1e-4), "mismatch (fused large)"

    # Test 3: force the general tiled path (K accumulation + in-kernel K-tail
    # masking) by shrinking the tile budget; same data as test 2.
    out3 = jax.block_until_ready(ensemble_fc(x2, w2, b2, max_vmem_budget=2 * 1024 * 1024))
    assert jnp.allclose(out3, ref2, atol=1e-4, rtol=1e-4), "mismatch (tiled K)"

    # Test 4: tiled path with boundary M/N blocks and several K/N tiles.
    E4, B4, In4, Out4 = 2, 300, 700, 400
    k1, k2, k3, key = jax.random.split(key, 4)
    x4 = jax.random.normal(k1, (E4, B4, In4), dtype=jnp.float32)
    w4 = jax.random.normal(k2, (E4, In4, Out4), dtype=jnp.float32) * 0.05
    b4 = jax.random.normal(k3, (E4, 1, Out4), dtype=jnp.float32) * 0.1
    out4 = jax.block_until_ready(ensemble_fc(x4, w4, b4, max_vmem_budget=1 * 1024 * 1024))
    ref4 = _reference(x4, w4, b4)
    assert jnp.allclose(out4, ref4, atol=1e-4, rtol=1e-4), "mismatch (tiled MN boundary)"

    print("KERNEL_OK")
</pallas_src>

<mosaic_0001>
module attributes {stable_mosaic.version = 11 : i64} {
  func.func @_fused_kernel(%arg0: i32, %arg1: i32, %arg2: memref<2x8x32xf32, #tpu.memory_space<vmem>>, %arg3: memref<2x32x32xf32, #tpu.memory_space<vmem>>, %arg4: memref<2x1x32xf32, #tpu.memory_space<vmem>>, %arg5: memref<2x8x32xf32, #tpu.memory_space<vmem>>) attributes {dimension_semantics = [#tpu.dimension_semantics<parallel>, #tpu.dimension_semantics<parallel>], iteration_bounds = array<i64: 2, 1>, scalar_prefetch = 0 : i64, scratch_operands = 0 : i64, tpu.core_type = #tpu.core_type<tc>, window_params = [{transform_indices = @transform_0, window_bounds = array<i64: 2, 8, 32>}, {transform_indices = @transform_1, window_bounds = array<i64: 2, 32, 32>}, {transform_indices = @transform_2, window_bounds = array<i64: 2, 1, 32>}, {transform_indices = @transform_3, window_bounds = array<i64: 2, 8, 32>}]} {
    %c0 = arith.constant 0 : index
    %c0_0 = arith.constant 0 : index
    %c0_1 = arith.constant 0 : index
    %0 = vector.load %arg2[%c0, %c0_0, %c0_1] : memref<2x8x32xf32, #tpu.memory_space<vmem>>, vector<1x8x32xf32>
    %1 = vector.shape_cast %0 : vector<1x8x32xf32> to vector<8x32xf32>
    %c0_2 = arith.constant 0 : index
    %c0_3 = arith.constant 0 : index
    %c0_4 = arith.constant 0 : index
    %2 = vector.load %arg3[%c0_2, %c0_3, %c0_4] : memref<2x32x32xf32, #tpu.memory_space<vmem>>, vector<1x32x32xf32>
    %3 = vector.shape_cast %2 : vector<1x32x32xf32> to vector<32x32xf32>
    %cst = arith.constant dense<0.000000e+00> : vector<8x32xf32>
    %4 = tpu.matmul %1, %3, %cst {dimension_numbers = #tpu.dot_dimension_numbers<[1], [0], [0], [1], [0, 0, 1, 1], [], []>} : vector<8x32xf32>, vector<32x32xf32>, vector<8x32xf32> -> vector<8x32xf32>
    %c0_5 = arith.constant 0 : index
    %c0_6 = arith.constant 0 : index
    %c0_7 = arith.constant 0 : index
    %5 = vector.load %arg4[%c0_5, %c0_6, %c0_7] : memref<2x1x32xf32, #tpu.memory_space<vmem>>, vector<1x1x32xf32>
    %6 = vector.shape_cast %5 : vector<1x1x32xf32> to vector<1x32xf32>
    %7 = vector.broadcast %6 : vector<1x32xf32> to vector<8x32xf32>
    %8 = arith.addf %4, %7 : vector<8x32xf32>
    %c0_8 = arith.constant 0 : index
    %c0_9 = arith.constant 0 : index
    %c0_10 = arith.constant 0 : index
    %9 = vector.load %arg5[%c0_8, %c0_9, %c0_10] : memref<2x8x32xf32, #tpu.memory_space<vmem>>, vector<1x8x32xf32>
    %10 = vector.shape_cast %9 : vector<1x8x32xf32> to vector<8x32xf32>
    %11 = vector.shape_cast %8 : vector<8x32xf32> to vector<1x8x32xf32>
    tpu.vector_store %arg5[%c0_8, %c0_9, %c0_10], %11 {strides = array<i32>} : memref<2x8x32xf32, #tpu.memory_space<vmem>>, vector<1x8x32xf32>,
    %c1 = arith.constant 1 : index
    %c0_11 = arith.constant 0 : index
    %c0_12 = arith.constant 0 : index
    %12 = vector.load %arg2[%c1, %c0_11, %c0_12] : memref<2x8x32xf32, #tpu.memory_space<vmem>>, vector<1x8x32xf32>
    %13 = vector.shape_cast %12 : vector<1x8x32xf32> to vector<8x32xf32>
    %c1_13 = arith.constant 1 : index
    %c0_14 = arith.constant 0 : index
    %c0_15 = arith.constant 0 : index
    %14 = vector.load %arg3[%c1_13, %c0_14, %c0_15] : memref<2x32x32xf32, #tpu.memory_space<vmem>>, vector<1x32x32xf32>
    %15 = vector.shape_cast %14 : vector<1x32x32xf32> to vector<32x32xf32>
    %cst_16 = arith.constant dense<0.000000e+00> : vector<8x32xf32>
    %16 = tpu.matmul %13, %15, %cst_16 {dimension_numbers = #tpu.dot_dimension_numbers<[1], [0], [0], [1], [0, 0, 1, 1], [], []>} : vector<8x32xf32>, vector<32x32xf32>, vector<8x32xf32> -> vector<8x32xf32>
    %c1_17 = arith.constant 1 : index
    %c0_18 = arith.constant 0 : index
    %c0_19 = arith.constant 0 : index
    %17 = vector.load %arg4[%c1_17, %c0_18, %c0_19] : memref<2x1x32xf32, #tpu.memory_space<vmem>>, vector<1x1x32xf32>
    %18 = vector.shape_cast %17 : vector<1x1x32xf32> to vector<1x32xf32>
    %19 = vector.broadcast %18 : vector<1x32xf32> to vector<8x32xf32>
    %20 = arith.addf %16, %19 : vector<8x32xf32>
    %c1_20 = arith.constant 1 : index
    %c0_21 = arith.constant 0 : index
    %c0_22 = arith.constant 0 : index
    %21 = vector.load %arg5[%c1_20, %c0_21, %c0_22] : memref<2x8x32xf32, #tpu.memory_space<vmem>>, vector<1x8x32xf32>
    %22 = vector.shape_cast %21 : vector<1x8x32xf32> to vector<8x32xf32>
    %23 = vector.shape_cast %20 : vector<8x32xf32> to vector<1x8x32xf32>
    tpu.vector_store %arg5[%c1_20, %c0_21, %c0_22], %23 {strides = array<i32>} : memref<2x8x32xf32, #tpu.memory_space<vmem>>, vector<1x8x32xf32>,
    return
  }
  func.func @transform_0(%arg0: i32, %arg1: i32) -> (i32, i32, i32) {
    %c0_i32 = arith.constant 0 : i32
    %c0_i32_0 = arith.constant 0 : i32
    return %arg0, %arg1, %c0_i32 : i32, i32, i32
  }
  func.func @transform_1(%arg0: i32, %arg1: i32) -> (i32, i32, i32) {
    %c0_i32 = arith.constant 0 : i32
    %c0_i32_0 = arith.constant 0 : i32
    %c0_i32_1 = arith.constant 0 : i32
    return %arg0, %c0_i32, %c0_i32_0 : i32, i32, i32
  }
  func.func @transform_2(%arg0: i32, %arg1: i32) -> (i32, i32, i32) {
    %c0_i32 = arith.constant 0 : i32
    %c0_i32_0 = arith.constant 0 : i32
    %c0_i32_1 = arith.constant 0 : i32
    return %arg0, %c0_i32, %c0_i32_0 : i32, i32, i32
  }
  func.func @transform_3(%arg0: i32, %arg1: i32) -> (i32, i32, i32) {
    %c0_i32 = arith.constant 0 : i32
    %c0_i32_0 = arith.constant 0 : i32
    return %arg0, %arg1, %c0_i32 : i32, i32, i32
  }
}

</mosaic_0001>

<llo_original>
// kernel: ensemble_fc.1
$region0: #{ensemble_fc.1}
  #allocation0 [shape = 'u32[]', space=smem, size = 0x4, offset = 0x4, fixed_abs, tag = 'smem constant byte address 0x4 - core index']
  #allocation1 [shape = 'u32[144,128]{1,0:T(1,128)}', space=vmem, size = 0x12000, scoped, tag = 'internal scratch']
  %s0 = inlined_call_operand.hbm [shape: f32[4,8,32], index: 0, kind: input, shape index: {}]
  %s1 = inlined_call_operand.hbm [shape: f32[4,32,32], index: 1, kind: input, shape index: {}]
  %s2 = inlined_call_operand.vmem [shape: f32[4,1,32], index: 2, kind: input, shape index: {}]
  %s3 = inlined_call_operand.hbm [shape: f32[4,8,32], index: 3, kind: output, shape index: {}]
  %s4 = sld [smem:[#allocation0]]
  $region53: #{ensemble_fc.1} parent=0
    _
  %s6 = ssub.s32 1, %s4
  %s7 = scalar_select 0, %s6, %s4
  $region1: #{ensemble_fc.1} parent=0
    #allocation2 [shape = 'u8[16384]{0}', space=vmem, size = 0x4000, scoped, tag = 'input window, operand 0']
    #allocation3 [shape = 's32[2]{0}', space=sflag, size = 0x8, scoped, tag = 'scoped memory for ensemble_fc.1']
    #allocation4 [shape = 's32[2]{0}', space=sflag, size = 0x8, scoped, tag = 'scoped memory for ensemble_fc.1']
    #allocation5 [shape = 'u8[65536]{0}', space=vmem, size = 0x10000, scoped, tag = 'input window, operand 1']
    #allocation6 [shape = 's32[2]{0}', space=sflag, size = 0x8, scoped, tag = 'scoped memory for ensemble_fc.1']
    #allocation7 [shape = 'u8[16384]{0}', space=vmem, size = 0x4000, scoped, tag = 'output window, operand 0']
    %8 = vsyncpa [#allocation3], 0
    %s9 = scalar_lea.sflag [#allocation3], 1
    %10 = vsyncpa %s9, 0
    %11 = vsyncpa [#allocation6], 0
    %s12 = scalar_lea.sflag [#allocation6], 1
    %13 = vsyncpa %s12, 0
    %14 = vsyncpa [#allocation4], 0
    %s15 = scalar_lea.sflag [#allocation4], 1
    %16 = vsyncpa %s15, 0
    loop: start=0, step=1, limit=4
    $region2: #{ensemble_fc.1} parent=1 // loop_pre_header
      _
    $region3: #{ensemble_fc.1} parent=1 // loop_header
      %s18 = sphi 0, %s22
      %p19 = scmp.ge.s32.totalorder %s18, 4
      %s25 = sphi 0, %s37
      %s26 = sphi 0, %s33
      %s27 = sphi 0, %s25
      %s28 = sphi 0, %s26
      %s29 = sphi 0, %s27
      %s30 = sphi 0, %s28
      %s42 = sphi 0, %s44
      %s45 = sphi 0, %s42
      %s46 = sphi 0, %s45
      %s62 = sphi 0, %s46
      %s68 = sphi 0, %s70
      %s71 = sphi 0, %s68
      %s72 = sphi 0, %s71
      %s88 = sphi 0, %s72
      %s94 = sphi 0, %s96
      %s97 = sphi 0, %s94
      %s98 = sphi 0, %s97
      %s114 = sphi 0, %s98
      %s122 = sphi 0, %s124
      %s125 = sphi 0, %s122
      %s126 = sphi 0, %s125
      %s142 = sphi 0, %s126
    $region4: #{ensemble_fc.1} parent=1 // loop_header_branch
      %21 = sbr.rel (%p19) target = $region8
    $region5: #{ensemble_fc.1} parent=1 // loop_body
      %s23 = ssub.s32 %s18, 1
      %s24 = ssub.s32 %s18, 2
      %s31 = sadd.s32 1, %s26
      %p32 = scmp.ge.s32.totalorder %s31, 1
      %s33 = scalar_select %p32, 0, %s31
      %s34 = sadd.s32 1, %s25
      %s35 = scalar_select %p32, %s34, %s25
      %p36 = scmp.ge.s32.totalorder %s35, 2
      %s37 = scalar_select %p36, 0, %s35
      %s38 = ssub.s32 %s25, %s37
      %s39 = ssub.s32 %s26, %s33
      %s40 = sor.u32 %s38, %s39
      %p41 = scmp.eq.s32.totalorder %s40, 0
      %s43 = sadd.s32 %s42, 1
      %s44 = scalar_select %p41, %s42, %s43
      %p47 = pneg %p41
      %p48 = scmp.eq.s32.totalorder %s18, 1
      %p49 = por %p47, %p48
      %p50 = scmp.ne.s32.totalorder %s42, %s45
      %p51 = scmp.eq.s32.totalorder %s18, 0
      %p52 = por %p50, %p51
      %p53 = scmp.ne.s32.totalorder %s42, %s45
      %p54 = scmp.eq.s32.totalorder %s23, 1
      %p55 = por %p53, %p54
      %p56 = scmp.ne.s32.totalorder %s45, %s46
      %p57 = scmp.eq.s32.totalorder %s23, 0
      %p58 = por %p56, %p57
      %p59 = scmp.ne.s32.totalorder %s45, %s46
      %p60 = scmp.eq.s32.totalorder %s24, 1
      %p61 = por %p59, %p60
      %p63 = scmp.ne.s32.totalorder %s46, %s62
      %p64 = scmp.eq.s32.totalorder %s24, 0
      %p65 = por %p63, %p64
      %s66 = ssub.s32 %s25, %s37
      %p67 = scmp.eq.s32.totalorder %s66, 0
      %s69 = sadd.s32 %s68, 1
      %s70 = scalar_select %p67, %s68, %s69
      %p73 = pneg %p67
      %p74 = scmp.eq.s32.totalorder %s18, 1
      %p75 = por %p73, %p74
      %p76 = scmp.ne.s32.totalorder %s68, %s71
      %p77 = scmp.eq.s32.totalorder %s18, 0
      %p78 = por %p76, %p77
      %p79 = scmp.ne.s32.totalorder %s68, %s71
      %p80 = scmp.eq.s32.totalorder %s23, 1
      %p81 = por %p79, %p80
      %p82 = scmp.ne.s32.totalorder %s71, %s72
      %p83 = scmp.eq.s32.totalorder %s23, 0
      %p84 = por %p82, %p83
      %p85 = scmp.ne.s32.totalorder %s71, %s72
      %p86 = scmp.eq.s32.totalorder %s24, 1
      %p87 = por %p85, %p86
      %p89 = scmp.ne.s32.totalorder %s72, %s88
      %p90 = scmp.eq.s32.totalorder %s24, 0
      %p91 = por %p89, %p90
      %s92 = ssub.s32 %s25, %s37
      %p93 = scmp.eq.s32.totalorder %s92, 0
      %s95 = sadd.s32 %s94, 1
      %s96 = scalar_select %p93, %s94, %s95
      %p99 = pneg %p93
      %p100 = scmp.eq.s32.totalorder %s18, 1
      %p101 = por %p99, %p100
      %p102 = scmp.ne.s32.totalorder %s94, %s97
      %p103 = scmp.eq.s32.totalorder %s18, 0
      %p104 = por %p102, %p103
      %p105 = scmp.ne.s32.totalorder %s94, %s97
      %p106 = scmp.eq.s32.totalorder %s23, 1
      %p107 = por %p105, %p106
      %p108 = scmp.ne.s32.totalorder %s97, %s98
      %p109 = scmp.eq.s32.totalorder %s23, 0
      %p110 = por %p108, %p109
      %p111 = scmp.ne.s32.totalorder %s97, %s98
      %p112 = scmp.eq.s32.totalorder %s24, 1
      %p113 = por %p111, %p112
      %p115 = scmp.ne.s32.totalorder %s98, %s114
      %p116 = scmp.eq.s32.totalorder %s24, 0
      %p117 = por %p115, %p116
      %s118 = ssub.s32 %s25, %s37
      %s119 = ssub.s32 %s26, %s33
      %s120 = sor.u32 %s118, %s119
      %p121 = scmp.eq.s32.totalorder %s120, 0
      %s123 = sadd.s32 %s122, 1
      %s124 = scalar_select %p121, %s122, %s123
      %p127 = pneg %p121
      %p128 = scmp.eq.s32.totalorder %s18, 1
      %p129 = por %p127, %p128
      %p130 = scmp.ne.s32.totalorder %s122, %s125
      %p131 = scmp.eq.s32.totalorder %s18, 0
      %p132 = por %p130, %p131
      %p133 = scmp.ne.s32.totalorder %s122, %s125
      %p134 = scmp.eq.s32.totalorder %s23, 1
      %p135 = por %p133, %p134
      %p136 = scmp.ne.s32.totalorder %s125, %s126
      %p137 = scmp.eq.s32.totalorder %s23, 0
      %p138 = por %p136, %p137
      %p139 = scmp.ne.s32.totalorder %s125, %s126
      %p140 = scmp.eq.s32.totalorder %s24, 1
      %p141 = por %p139, %p140
      %p143 = scmp.ne.s32.totalorder %s126, %s142
      %p144 = scmp.eq.s32.totalorder %s24, 0
      %p145 = por %p143, %p144
      %p146 = scmp.le.s32.totalorder 1, %s18
      %p147 = scmp.lt.s32.totalorder %s18, 3
      %p148 = pnand %p146, %p147
      %p149 = pneg %p148
      // Predicated region
      $region9: #{ensemble_fc.1} parent=5 // pred_check
        _
      $region10: #{ensemble_fc.1} parent=5 // pred_check_branch
        %151 = sbr.rel (%p148) target = $region12
      $region11: #{ensemble_fc.1} parent=5 // pred_region
        %s152 = ssub.s32 %s18, 1
      $region12: #{ensemble_fc.1} parent=5 // pred_fallthru
        _
      %p153 = scmp.lt.s32.totalorder %s18, 2
      // Predicated region
      $region13: #{ensemble_fc.1} parent=5 // pred_check
        %p154 = pneg %p153
      $region14: #{ensemble_fc.1} parent=5 // pred_check_branch
        %156 = sbr.rel (%p154) target = $region16
      $region15: #{ensemble_fc.1} parent=5 // pred_region
        // Predicated region
        $region17: #{ensemble_fc.1} parent=15 // pred_check
          %p157 = pneg %p52
        $region18: #{ensemble_fc.1} parent=15 // pred_check_branch
          %159 = sbr.rel (%p157) target = $region20
        $region19: #{ensemble_fc.1} parent=15 // pred_region
          %s160 = sand.u32 %s42, 1
          %s161 = scalar_lea.sflag [#allocation3], %s160
          %s162 = sand.u32 %s42, 1
          %s163 = smul.addr %s162, 16
          %s164 = scalar_lea.vmem [#allocation2], %s163
          %s165 = smul.u32 2, %s25
          %s167 = ssub.s32 256, 256
          %168 = vsyncadd %s161, %s167
          %s169 = sadd.s32 %s26, %s165
          %s170 = smul.addr %s169, 128
          %s171 = scalar_lea.hbm %s0, %s170
          %s172 = sshll.u32 %s164, 4
          %s173 = int_to_ptr.vmem [resolvable:$true] %s172
          %178 = dma.hbm_to_vmem [thread:$0]  %s171, 256, %s173, %s161, 128, 128, 8
        $region20: #{ensemble_fc.1} parent=15 // pred_fallthru
          _
        // Predicated region
        $region21: #{ensemble_fc.1} parent=15 // pred_check
          %p179 = pneg %p78
        $region22: #{ensemble_fc.1} parent=15 // pred_check_branch
          %181 = sbr.rel (%p179) target = $region24
        $region23: #{ensemble_fc.1} parent=15 // pred_region
          %s182 = sand.u32 %s68, 1
          %s183 = scalar_lea.sflag [#allocation6], %s182
          %s184 = sand.u32 %s68, 1
          %s185 = smul.addr %s184, 64
          %s186 = scalar_lea.vmem [#allocation5], %s185
          %s187 = smul.u32 2, %s25
          %s189 = ssub.s32 1024, 1024
          %190 = vsyncadd %s183, %s189
          %s191 = smul.addr %s187, 4
          %s192 = smul.addr %s191, 128
          %s193 = scalar_lea.hbm %s1, %s192
          %s194 = sshll.u32 %s186, 4
          %s195 = int_to_ptr.vmem [resolvable:$true] %s194
          %200 = dma.hbm_to_vmem [thread:$0]  %s193, 1024, %s195, %s183, 128, 128, 8
        $region24: #{ensemble_fc.1} parent=15 // pred_fallthru
          _
        // Predicated region
        $region25: #{ensemble_fc.1} parent=15 // pred_check
          %p201 = pneg %p104
        $region26: #{ensemble_fc.1} parent=15 // pred_check_branch
          %203 = sbr.rel (%p201) target = $region28
        $region27: #{ensemble_fc.1} parent=15 // pred_region
          %s204 = smul.u32 2, %s25
          %p205 = scmp.lt.s32.totalorder %s204, 3
          %s206 = scalar_select %p205, %s204, 3
          %s207 = scalar_lea.vmem %s2, %s206
          %s208 = smul.u32 2, %s25
        $region28: #{ensemble_fc.1} parent=15 // pred_fallthru
          _
      $region16: #{ensemble_fc.1} parent=5 // pred_fallthru
        _
      %p209 = scmp.le.s32.totalorder 1, %s18
      %p210 = scmp.lt.s32.totalorder %s18, 3
      %p211 = pnand %p209, %p210
      %p212 = pneg %p211
      // Predicated region
      $region29: #{ensemble_fc.1} parent=5 // pred_check
        _
      $region30: #{ensemble_fc.1} parent=5 // pred_check_branch
        %214 = sbr.rel (%p211) target = $region32
      $region31: #{ensemble_fc.1} parent=5 // pred_region
        %s215 = ssub.s32 %s18, 1
        %s216 = sand.u32 %s45, 1
        %s217 = scalar_lea.sflag [#allocation3], %s216
        %s218 = sand.u32 %s45, 1
        %s219 = smul.addr %s218, 16
        %s220 = scalar_lea.vmem [#allocation2], %s219
        // Predicated region
        $region33: #{ensemble_fc.1} parent=31 // pred_check
          %p221 = pneg %p58
        $region34: #{ensemble_fc.1} parent=31 // pred_check_branch
          %223 = sbr.rel (%p221) target = $region36
        $region35: #{ensemble_fc.1} parent=31 // pred_region
          %224 = dma.done %s217, 256
        $region36: #{ensemble_fc.1} parent=31 // pred_fallthru
          _
        %s225 = sand.u32 %s71, 1
        %s226 = scalar_lea.sflag [#allocation6], %s225
        %s227 = sand.u32 %s71, 1
        %s228 = smul.addr %s227, 64
        %s229 = scalar_lea.vmem [#allocation5], %s228
        // Predicated region
        $region37: #{ensemble_fc.1} parent=31 // pred_check
          %p230 = pneg %p84
        $region38: #{ensemble_fc.1} parent=31 // pred_check_branch
          %232 = sbr.rel (%p230) target = $region40
        $region39: #{ensemble_fc.1} parent=31 // pred_region
          %233 = dma.done %s226, 1024
        $region40: #{ensemble_fc.1} parent=31 // pred_fallthru
          _
        %s234 = sand.u32 %s45, 1
        %s235 = scalar_lea.sflag [#allocation3], %s234
        %s236 = sand.u32 %s45, 1
        %s237 = smul.addr %s236, 16
        %s238 = scalar_lea.vmem [#allocation2], %s237
        %p239 = pneg %p58
        %p240 = pneg %p55
        %s241 = sand.u32 %s71, 1
        %s242 = scalar_lea.sflag [#allocation6], %s241
        %s243 = sand.u32 %s71, 1
        %s244 = smul.addr %s243, 64
        %s245 = scalar_lea.vmem [#allocation5], %s244
        %p246 = pneg %p84
        %p247 = pneg %p81
        %s248 = smul.u32 2, %s27
        %p249 = scmp.lt.s32.totalorder %s248, 3
        %s250 = scalar_select %p249, %s248, 3
        %s251 = scalar_lea.vmem %s2, %s250
        %p252 = pneg %p110
        %p253 = pneg %p107
        %p254 = pneg %p138
        %p255 = pneg %p135
        %s256 = sand.u32 %s125, 1
        %s257 = scalar_lea.sflag [#allocation4], %s256
        %s258 = sand.u32 %s125, 1
        %s259 = smul.addr %s258, 16
        %s260 = scalar_lea.vmem [#allocation7], %s259
        %s261 = smul.u32 2, %s27
        %s262 = smul.u32 2, %s27
        %s263 = smul.u32 2, %s27
        %p264 = scmp.lt.s32.totalorder %s263, 3
        %s265 = scalar_select %p264, %s263, 3
        %s266 = scalar_lea.vmem %s2, %s265
        %s267 = smul.u32 2, %s27
        %s268 = smul.u32 2, %s27
        %v269 = vld [vmem:[%s220] sm:$0xff]
        %v270 = vld [vmem:[%s229] sm:$0xff]
        %v271 = vld [vmem:[%s229 + $0x8] sm:$0xff]
        %v272 = vld [vmem:[%s229 + $0x10] sm:$0xff]
        %v273 = vld [vmem:[%s229 + $0x18] sm:$0xff]
        %v274 = vld [vmem:[%s266] sm:$0x1]
        %v276 = vlaneseq
        %v277 = vshrl.u32 %v276, 7
        %v278 = vsub.s32 0, %v277
        %v279 = vrot.slane %v274, %v278
        %vm281 = vcmask 261120
        %v283 = vsel %vm281, %v269, 0
        %285 = vmatprep.subr.mxu0 0.0
        %286 = vmatpush1.msra.mxu0 %v270
        %287 = vmatprep.subr.mxu0 0.0
        %288 = vmatpush1.msra.mxu0 %v271
        %289 = vmatprep.subr.mxu0 0.0
        %290 = vmatpush1.msra.mxu0 %v272
        %291 = vmatprep.subr.mxu0 0.0
        %292 = vmatpush1.msra.mxu0 %v273
        %293 = vmatprep.subr.mxu0 0.0
        %294 = vmatpush1.msra.mxu0 0.0
        %295 = vmatprep.subr.mxu0 0.0
        %296 = vmatpush1.msra.mxu0 0.0
        %297 = vmatprep.subr.mxu0 0.0
        %298 = vmatpush1.msra.mxu0 0.0
        %299 = vmatprep.subr.mxu0 0.0
        %300 = vmatpush1.msra.mxu0 0.0
        %301 = vmatprep.subr.mxu0 0.0
        %302 = vmatpush1.msra.mxu0 0.0
        %303 = vmatprep.subr.mxu0 0.0
        %304 = vmatpush1.msra.mxu0 0.0
        %305 = vmatprep.subr.mxu0 0.0
        %306 = vmatpush1.msra.mxu0 0.0
        %307 = vmatprep.subr.mxu0 0.0
        %308 = vmatpush1.msra.mxu0 0.0
        %309 = vmatprep.subr.mxu0 0.0
        %310 = vmatpush1.msra.mxu0 0.0
        %311 = vmatprep.subr.mxu0 0.0
        %312 = vmatpush1.msra.mxu0 0.0
        %313 = vmatprep.subr.mxu0 0.0
        %314 = vmatpush1.msra.mxu0 0.0
        %315 = vmatprep.subr.mxu0 0.0
        %316 = vmatpush1.msra.mxu0 0.0
        %317 = vmatprep.subr.mxu0 0.0
        %318 = vmatpush1.msra.mxu0 0.0
        %319 = vmatprep.subr.mxu0 0.0
        %320 = vmatpush1.msra.mxu0 0.0
        %321 = vmatprep.subr.mxu0 0.0
        %322 = vmatpush1.msra.mxu0 0.0
        %323 = vmatprep.subr.mxu0 0.0
        %324 = vmatpush1.msra.mxu0 0.0
        %325 = vmatprep.subr.mxu0 0.0
        %326 = vmatpush1.msra.mxu0 0.0
        %327 = vmatprep.subr.mxu0 0.0
        %328 = vmatpush1.msra.mxu0 0.0
        %329 = vmatprep.subr.mxu0 0.0
        %330 = vmatpush1.msra.mxu0 0.0
        %331 = vmatprep.subr.mxu0 0.0
        %332 = vmatpush1.msra.mxu0 0.0
        %333 = vmatprep.subr.mxu0 0.0
        %334 = vmatpush1.msra.mxu0 0.0
        %335 = vmatprep.subr.mxu0 0.0
        %336 = vmatpush1.msra.mxu0 0.0
        %337 = vmatprep.subr.mxu0 0.0
        %338 = vmatpush1.msra.mxu0 0.0
        %339 = vmatprep.subr.mxu0 0.0
        %340 = vmatpush1.msra.mxu0 0.0
        %341 = vmatprep.subr.mxu0 0.0
        %342 = vmatpush1.msra.mxu0 0.0
        %343 = vmatprep.subr.mxu0 0.0
        %344 = vmatpush1.msra.mxu0 0.0
        %345 = vmatprep.subr.mxu0 0.0
        %346 = vmatpush1.msra.mxu0 0.0
        %347 = vmatprep.subr.mxu0 0.0
        %348 = vmatpush1.msra.mxu0 0.0
        %349 = vmatprep.mubr.f32.mxu0 0.0
        %350 = vmatmul.mubr.f32.gmra.mrb[0].mxu0 %v283
        %v351 = vpop.f32.mrb[0].mxu0
        %v352 = vadd.f32 %v279, %v351
        %v353 = vpop.f32.mrb[0].mxu0
        %354 = vdwg.mxu0
        %355 = vst.msk [vmem:[%s260] sm:$0xff] %vm281, %v352
        %s356 = scalar_lea.vmem %s220, 8 [#allocation2]
        %v357 = vld [vmem:[%s356] sm:$0xff]
        %s358 = scalar_lea.vmem %s229, 32 [#allocation5]
        %v359 = vld [vmem:[%s358] sm:$0xff]
        %v360 = vld [vmem:[%s358 + $0x8] sm:$0xff]
        %v361 = vld [vmem:[%s358 + $0x10] sm:$0xff]
        %v362 = vld [vmem:[%s358 + $0x18] sm:$0xff]
        %s363 = scalar_lea.vmem %s266, 1
        %v364 = vld [vmem:[%s363] sm:$0x1]
        %v366 = vlaneseq
        %v367 = vshrl.u32 %v366, 7
        %v368 = vsub.s32 0, %v367
        %v369 = vrot.slane %v364, %v368
        %v372 = vsel %vm281, %v357, 0
        %374 = vmatprep.subr.mxu0 0.0
        %375 = vmatpush1.msra.mxu0 %v359
        %376 = vmatprep.subr.mxu0 0.0
        %377 = vmatpush1.msra.mxu0 %v360
        %378 = vmatprep.subr.mxu0 0.0
        %379 = vmatpush1.msra.mxu0 %v361
        %380 = vmatprep.subr.mxu0 0.0
        %381 = vmatpush1.msra.mxu0 %v362
        %382 = vmatprep.subr.mxu0 0.0
        %383 = vmatpush1.msra.mxu0 0.0
        %384 = vmatprep.subr.mxu0 0.0
        %385 = vmatpush1.msra.mxu0 0.0
        %386 = vmatprep.subr.mxu0 0.0
        %387 = vmatpush1.msra.mxu0 0.0
        %388 = vmatprep.subr.mxu0 0.0
        %389 = vmatpush1.msra.mxu0 0.0
        %390 = vmatprep.subr.mxu0 0.0
        %391 = vmatpush1.msra.mxu0 0.0
        %392 = vmatprep.subr.mxu0 0.0
        %393 = vmatpush1.msra.mxu0 0.0
        %394 = vmatprep.subr.mxu0 0.0
        %395 = vmatpush1.msra.mxu0 0.0
        %396 = vmatprep.subr.mxu0 0.0
        %397 = vmatpush1.msra.mxu0 0.0
        %398 = vmatprep.subr.mxu0 0.0
        %399 = vmatpush1.msra.mxu0 0.0
        %400 = vmatprep.subr.mxu0 0.0
        %401 = vmatpush1.msra.mxu0 0.0
        %402 = vmatprep.subr.mxu0 0.0
        %403 = vmatpush1.msra.mxu0 0.0
        %404 = vmatprep.subr.mxu0 0.0
        %405 = vmatpush1.msra.mxu0 0.0
        %406 = vmatprep.subr.mxu0 0.0
        %407 = vmatpush1.msra.mxu0 0.0
        %408 = vmatprep.subr.mxu0 0.0
        %409 = vmatpush1.msra.mxu0 0.0
        %410 = vmatprep.subr.mxu0 0.0
        %411 = vmatpush1.msra.mxu0 0.0
        %412 = vmatprep.subr.mxu0 0.0
        %413 = vmatpush1.msra.mxu0 0.0
        %414 = vmatprep.subr.mxu0 0.0
        %415 = vmatpush1.msra.mxu0 0.0
        %416 = vmatprep.subr.mxu0 0.0
        %417 = vmatpush1.msra.mxu0 0.0
        %418 = vmatprep.subr.mxu0 0.0
        %419 = vmatpush1.msra.mxu0 0.0
        %420 = vmatprep.subr.mxu0 0.0
        %421 = vmatpush1.msra.mxu0 0.0
        %422 = vmatprep.subr.mxu0 0.0
        %423 = vmatpush1.msra.mxu0 0.0
        %424 = vmatprep.subr.mxu0 0.0
        %425 = vmatpush1.msra.mxu0 0.0
        %426 = vmatprep.subr.mxu0 0.0
        %427 = vmatpush1.msra.mxu0 0.0
        %428 = vmatprep.subr.mxu0 0.0
        %429 = vmatpush1.msra.mxu0 0.0
        %430 = vmatprep.subr.mxu0 0.0
        %431 = vmatpush1.msra.mxu0 0.0
        %432 = vmatprep.subr.mxu0 0.0
        %433 = vmatpush1.msra.mxu0 0.0
        %434 = vmatprep.subr.mxu0 0.0
        %435 = vmatpush1.msra.mxu0 0.0
        %436 = vmatprep.subr.mxu0 0.0
        %437 = vmatpush1.msra.mxu0 0.0
        %438 = vmatprep.mubr.f32.mxu0 0.0
        %439 = vmatmul.mubr.f32.gmra.mrb[0].mxu0 %v372
        %v440 = vpop.f32.mrb[0].mxu0
        %v441 = vadd.f32 %v369, %v440
        %v442 = vpop.f32.mrb[0].mxu0
        %443 = vdwg.mxu0
        %s444 = scalar_lea.vmem %s260, 8 [#allocation7]
        %445 = vst.msk [vmem:[%s444] sm:$0xff] %vm281, %v441
        %s446 = sand.u32 %s125, 1
        %s447 = scalar_lea.sflag [#allocation4], %s446
        %s448 = sand.u32 %s125, 1
        %s449 = smul.addr %s448, 16
        %s450 = scalar_lea.vmem [#allocation7], %s449
        // Predicated region
        $region41: #{ensemble_fc.1} parent=31 // pred_check
          %p451 = pneg %p135
        $region42: #{ensemble_fc.1} parent=31 // pred_check_branch
          %453 = sbr.rel (%p451) target = $region44
        $region43: #{ensemble_fc.1} parent=31 // pred_region
          %s454 = smul.u32 2, %s27
          %s456 = ssub.s32 256, 256
          %457 = vsyncadd %s447, %s456
          %s458 = sadd.s32 %s28, %s454
          %s459 = smul.addr %s458, 128
          %s460 = scalar_lea.hbm %s3, %s459
          %s461 = sshll.u32 %s450, 4
          %s462 = int_to_ptr.vmem [resolvable:$true] %s461
          %467 = dma.vmem_to_hbm [thread:$0]  %s462, 256, %s460, %s447, 128, 128, 8
        $region44: #{ensemble_fc.1} parent=31 // pred_fallthru
          _
      $region32: #{ensemble_fc.1} parent=5 // pred_fallthru
        _
      %p468 = scmp.le.s32.totalorder 2, %s18
      // Predicated region
      $region45: #{ensemble_fc.1} parent=5 // pred_check
        %p469 = pneg %p468
      $region46: #{ensemble_fc.1} parent=5 // pred_check_branch
        %471 = sbr.rel (%p469) target = $region48
      $region47: #{ensemble_fc.1} parent=5 // pred_region
        %s472 = ssub.s32 %s18, 2
        // Predicated region
        $region49: #{ensemble_fc.1} parent=47 // pred_check
          %p473 = pneg %p141
        $region50: #{ensemble_fc.1} parent=47 // pred_check_branch
          %475 = sbr.rel (%p473) target = $region52
        $region51: #{ensemble_fc.1} parent=47 // pred_region
          %s476 = sand.u32 %s126, 1
          %s477 = scalar_lea.sflag [#allocation4], %s476
          %s478 = sand.u32 %s126, 1
          %s479 = smul.addr %s478, 16
          %s480 = scalar_lea.vmem [#allocation7], %s479
          %481 = dma.done %s477, 256
        $region52: #{ensemble_fc.1} parent=47 // pred_fallthru
          _
      $region48: #{ensemble_fc.1} parent=5 // pred_fallthru
        _
    $region6: #{ensemble_fc.1} parent=1 // loop_footer
      %s22 = sadd.s32 1, %s18
    $region7: #{ensemble_fc.1} parent=1 // loop_footer_branch
      %17 = sbr.rel target = $region3
    $region8: #{ensemble_fc.1} parent=1 // loop_exit
      _
    %482 = vsyncpa [#allocation3], 1
    %s483 = scalar_lea.sflag [#allocation3], 1
    %484 = vsyncpa %s483, 1
    %485 = vsyncpa [#allocation6], 1
    %s486 = scalar_lea.sflag [#allocation6], 1
    %487 = vsyncpa %s486, 1
    %488 = vsyncpa [#allocation4], 1
    %s489 = scalar_lea.sflag [#allocation4], 1
    %490 = vsyncpa %s489, 1

</llo_original>
